<compile_context>
chip_gen: v7x
topology: tpu7x:2x2x1
jax: 0.10.0
libtpu: 0.0.40
codegen_flags: <defaults>
</compile_context>

<pallas_src>
import jax
import jax.numpy as jnp
from jax.experimental import pallas as pl
from jax.experimental.pallas import tpu as pltpu


def _round_up(x, k):
    return ((x + k - 1) // k) * k


def _vmem_capacity_bytes():
    """Per-TensorCore VMEM capacity; conservative fallback if the query fails."""
    try:
        info = pltpu.get_tpu_info()
        cap = getattr(info, "vmem_capacity_bytes", None)
        if cap:
            return int(cap)
    except Exception:
        pass
    return 64 * 1024 * 1024  # v7x per-TC VMEM (smallest of the three generations)


def _dot_t(a_row, b):
    """(1, K) x (M, K) -> (1, M): contract the last dims (MXU handles the 'b.T')."""
    return jax.lax.dot_general(
        a_row, b,
        dimension_numbers=(((1,), (1,)), ((), ())),
        preferred_element_type=jnp.float32,
    )


def _make_dnn_kernel(num_layers):
    """Kernel refs:
       num_layers >= 2: (x1, x2, w0a, w0b, b0, [w_i, b_i]*, w_last_row, b_last, out)
       num_layers == 1: (x1, x2, w0a_row, w0b_row, b_last, out)
    """

    def kernel(*refs):
        x1 = refs[0][...]
        x2 = refs[1][...]
        o_ref = refs[-1]

        if num_layers == 1:
            w0a, w0b, b = refs[2][...], refs[3][...], refs[4][...]
            row = _dot_t(w0a, x1) + _dot_t(w0b, x2) + b           # (1, TILE_M)
        else:
            w0a, w0b, b0 = refs[2][...], refs[3][...], refs[4][...]
            # First layer without materializing the lane-axis concat.
            # x1/x2/w0 may be bf16; accumulation is f32 on the MXU.
            x = (jnp.dot(x1, w0a, preferred_element_type=jnp.float32)
                 + jnp.dot(x2, w0b, preferred_element_type=jnp.float32)
                 + b0)
            x = jnp.maximum(x, 0.0)                                # ReLU (f32)
            idx = 5
            for _ in range(num_layers - 2):
                w = refs[idx][...]
                b = refs[idx + 1][...]
                idx += 2
                x = jnp.maximum(
                    jnp.dot(x, w, preferred_element_type=jnp.float32) + b, 0.0)
            w_last = refs[idx][...]      # (1, H_last) f32
            b_last = refs[idx + 1][...]  # (1, 1) f32
            # Final (H -> 1) layer produced directly as a lane-dense row.
            row = _dot_t(w_last, x) + b_last                       # (1, TILE_M)

        o_ref[...] = row.astype(o_ref.dtype)

    return kernel


def init_dnn_params(dims, key):
    """Deterministic init mirroring nn.Linear defaults: U(-1/sqrt(fan_in), 1/sqrt(fan_in))."""
    params = []
    for i in range(len(dims) - 1):
        fan_in, fan_out = dims[i], dims[i + 1]
        key, kw, kb = jax.random.split(key, 3)
        bound = 1.0 / jnp.sqrt(jnp.float32(fan_in))
        w = jax.random.uniform(kw, (fan_in, fan_out), jnp.float32, -bound, bound)
        b = jax.random.uniform(kb, (1, fan_out), jnp.float32, -bound, bound)
        params.append((w, b))
    return params


def dnn_predictor_forward(first_vector, second_vector, params, *,
                          compute_dtype=jnp.bfloat16, tile_cap=16384):
    """Pallas implementation of DNNPredictor.forward.

    first_vector, second_vector: (batch, *, dim); returns (batch, *) float32.
    compute_dtype: dtype for x1/x2 and W0a/W0b (default bf16, ~2x less HBM
    traffic; f32 accumulation is kept). Use jnp.float32 for exact parity.
    """
    assert first_vector.shape == second_vector.shape
    lead_shape = first_vector.shape[:-1]
    d = first_vector.shape[-1]
    m = 1
    for s in lead_shape:
        m *= s
    m = int(m)

    cd = jnp.dtype(compute_dtype)
    x1 = first_vector.reshape(m, d).astype(cd)
    x2 = second_vector.reshape(m, d).astype(cd)

    num_layers = len(params)
    w0, b0 = params[0]
    assert w0.shape[0] == 2 * d

    # Host-side re-packing of parameters (W0 split + cast; last layer as a row).
    # Only W0a/W0b are cast to compute_dtype (they multiply the bf16 inputs on
    # the MXU); every later weight/bias stays f32 so post-layer-0 math never
    # needs bf16 VPU ops (v5e has no bf16 VALU) and those tensors are resident
    # anyway (negligible HBM traffic).
    hidden = []
    if num_layers == 1:
        flat = [w0[:d].reshape(1, d).astype(cd),
                w0[d:].reshape(1, d).astype(cd),
                b0.reshape(1, 1).astype(jnp.float32)]
    else:
        flat = [w0[:d].astype(cd), w0[d:].astype(cd),
                b0.reshape(1, -1).astype(jnp.float32)]
        hidden.append(int(w0.shape[1]))
        for (w, b) in params[1:-1]:
            flat += [w.astype(jnp.float32), b.reshape(1, -1).astype(jnp.float32)]
            hidden.append(int(w.shape[1]))
        w_l, b_l = params[-1]
        flat += [w_l.reshape(1, -1).astype(jnp.float32),
                 b_l.reshape(1, 1).astype(jnp.float32)]

    # ---- VMEM-budget-aware row-tile selection (128-lane padding accounted) ----
    vmem_cap = _vmem_capacity_bytes()
    vmem_limit = int(min(vmem_cap * 3 // 4, 100 * 2 ** 20))
    budget = vmem_limit // 2                       # leave half as headroom

    # Resident params still get 2 pipeline buffers each; subtract their padded
    # footprint from the budget. (Tiny here; matters if the MLP grows.)
    wbytes = 0
    for p in flat:
        r, c = int(p.shape[0]), int(p.shape[1])
        wbytes += 2 * _round_up(r, 8) * _round_up(c, 128) * p.dtype.itemsize
    budget = max(budget - wbytes, 1 << 20)

    d_pad = _round_up(d, 128)
    per_row = 2 * 2 * d_pad * cd.itemsize                         # x1,x2 double-buffered blocks
    per_row += sum(_round_up(h, 128) for h in hidden) * 4         # f32 intermediates (conservative)
    per_row += 2 * 4                                              # double-buffered output row

    tile = (budget // per_row // 128) * 128
    # >= 2 grid steps whenever m allows it (keeps both v7x TensorCores busy).
    tile = min(tile, tile_cap, _round_up(pl.cdiv(m, 2), 128))
    tile = max(int(tile), 128)
    num_tiles = pl.cdiv(m, tile)
    # No jnp.pad: the ragged last tile reads past m (garbage rows) and those
    # output rows are sliced off below — no extra HBM copy of the inputs.

    x_spec = pl.BlockSpec((tile, d), lambda i: (i, 0))
    param_specs = [pl.BlockSpec(p.shape, lambda i: (0, 0)) for p in flat]

    flops = 2 * m * sum(int(w.shape[0]) * int(w.shape[1]) for (w, _) in params)
    bytes_accessed = (m * 2 * d * cd.itemsize                     # inputs (real dtype, unpadded)
                      + m * 4                                     # f32 output
                      + sum(int(p.size) * p.dtype.itemsize for p in flat))

    out = pl.pallas_call(
        _make_dnn_kernel(num_layers),
        grid=(num_tiles,),
        in_specs=[x_spec, x_spec] + param_specs,
        out_specs=pl.BlockSpec((1, tile), lambda i: (i, 0)),
        out_shape=jax.ShapeDtypeStruct((num_tiles, tile), jnp.float32),
        compiler_params=pltpu.CompilerParams(
            dimension_semantics=("parallel",),
            vmem_limit_bytes=vmem_limit),
        cost_estimate=pl.CostEstimate(
            flops=flops, transcendentals=0, bytes_accessed=bytes_accessed),
    )(x1, x2, *flat)

    # Drop garbage tail rows; .squeeze(dim=-1) is implicit in reshaping to (batch, *).
    return out.reshape(num_tiles * tile)[:m].reshape(lead_shape)


def _reference_forward(first_vector, second_vector, params):
    x = jnp.concatenate([first_vector, second_vector], axis=-1)
    for li, (w, b) in enumerate(params):
        x = x @ w + b[0]
        if li < len(params) - 1:
            x = jnp.maximum(x, 0.0)
    return jnp.squeeze(x, axis=-1)


if __name__ == "__main__":
    # dims[0] must equal 2 * dim of each input vector; dims[-1] == 1.
    dim = 32
    dims = [2 * dim, 32, 16, 1]
    batch, seq = 2, 8

    key = jax.random.PRNGKey(0)
    k1, k2, kp, k3, k4 = jax.random.split(key, 5)
    first_vector = jax.random.normal(k1, (batch, seq, dim), jnp.float32)
    second_vector = jax.random.normal(k2, (batch, seq, dim), jnp.float32)
    params = init_dnn_params(dims, kp)

    ref = _reference_forward(first_vector, second_vector, params)

    # Exact-parity check (f32 path).
    out_f32 = jax.block_until_ready(
        dnn_predictor_forward(first_vector, second_vector, params,
                              compute_dtype=jnp.float32))
    assert out_f32.shape == (batch, seq), out_f32.shape
    assert jnp.allclose(out_f32, ref, atol=1e-4, rtol=1e-4), "f32 mismatch vs reference"

    # Default bf16-input path (bandwidth-optimized); tolerance reflects bf16
    # input quantization, accumulation stays f32.
    out_bf16 = jax.block_until_ready(
        dnn_predictor_forward(first_vector, second_vector, params))
    assert out_bf16.shape == (batch, seq), out_bf16.shape
    assert jnp.allclose(out_bf16, ref, atol=3e-2, rtol=3e-2), "bf16 mismatch vs reference"

    # Ragged-tail check: m not a multiple of the row tile, no host-side padding.
    b2, s2 = 3, 47
    fv2 = jax.random.normal(k3, (b2, s2, dim), jnp.float32)
    sv2 = jax.random.normal(k4, (b2, s2, dim), jnp.float32)
    ref2 = _reference_forward(fv2, sv2, params)
    out2 = jax.block_until_ready(
        dnn_predictor_forward(fv2, sv2, params, compute_dtype=jnp.float32,
                              tile_cap=128))
    assert out2.shape == (b2, s2), out2.shape
    assert jnp.allclose(out2, ref2, atol=1e-4, rtol=1e-4), "ragged-tail mismatch"

    print("KERNEL_OK")
</pallas_src>

<mosaic_0001>
module attributes {stable_mosaic.version = 11 : i64} {
  func.func @kernel(%arg0: i32, %arg1: memref<128x32xf32, #tpu.memory_space<vmem>>, %arg2: memref<128x32xf32, #tpu.memory_space<vmem>>, %arg3: memref<32x32xf32, #tpu.memory_space<vmem>>, %arg4: memref<32x32xf32, #tpu.memory_space<vmem>>, %arg5: memref<1x32xf32, #tpu.memory_space<vmem>>, %arg6: memref<32x16xf32, #tpu.memory_space<vmem>>, %arg7: memref<1x16xf32, #tpu.memory_space<vmem>>, %arg8: memref<1x16xf32, #tpu.memory_space<vmem>>, %arg9: memref<1x1xf32, #tpu.memory_space<vmem>>, %arg10: memref<1x128xf32, #tpu.memory_space<vmem>>) attributes {dimension_semantics = [#tpu.dimension_semantics<parallel>], iteration_bounds = array<i64: 1>, scalar_prefetch = 0 : i64, scratch_operands = 0 : i64, tpu.core_type = #tpu.core_type<tc>, window_params = [{transform_indices = @transform_0, window_bounds = array<i64: 128, 32>}, {transform_indices = @transform_1, window_bounds = array<i64: 128, 32>}, {pipeline_mode = #tpu.pipeline_mode<synchronous>, transform_indices = @transform_2, window_bounds = array<i64: 32, 32>}, {pipeline_mode = #tpu.pipeline_mode<synchronous>, transform_indices = @transform_3, window_bounds = array<i64: 32, 32>}, {pipeline_mode = #tpu.pipeline_mode<synchronous>, transform_indices = @transform_4, window_bounds = array<i64: 1, 32>}, {pipeline_mode = #tpu.pipeline_mode<synchronous>, transform_indices = @transform_5, window_bounds = array<i64: 32, 16>}, {pipeline_mode = #tpu.pipeline_mode<synchronous>, transform_indices = @transform_6, window_bounds = array<i64: 1, 16>}, {pipeline_mode = #tpu.pipeline_mode<synchronous>, transform_indices = @transform_7, window_bounds = array<i64: 1, 16>}, {pipeline_mode = #tpu.pipeline_mode<synchronous>, transform_indices = @transform_8, window_bounds = array<i64: 1, 1>}, {transform_indices = @transform_9, window_bounds = array<i64: 1, 128>}]} {
    %c0 = arith.constant 0 : index
    %c0_0 = arith.constant 0 : index
    %0 = vector.load %arg1[%c0, %c0_0] : memref<128x32xf32, #tpu.memory_space<vmem>>, vector<128x32xf32>
    %c0_1 = arith.constant 0 : index
    %c0_2 = arith.constant 0 : index
    %1 = vector.load %arg2[%c0_1, %c0_2] : memref<128x32xf32, #tpu.memory_space<vmem>>, vector<128x32xf32>
    %c0_3 = arith.constant 0 : index
    %c0_4 = arith.constant 0 : index
    %2 = vector.load %arg3[%c0_3, %c0_4] : memref<32x32xf32, #tpu.memory_space<vmem>>, vector<32x32xf32>
    %c0_5 = arith.constant 0 : index
    %c0_6 = arith.constant 0 : index
    %3 = vector.load %arg4[%c0_5, %c0_6] : memref<32x32xf32, #tpu.memory_space<vmem>>, vector<32x32xf32>
    %c0_7 = arith.constant 0 : index
    %c0_8 = arith.constant 0 : index
    %4 = vector.load %arg5[%c0_7, %c0_8] : memref<1x32xf32, #tpu.memory_space<vmem>>, vector<1x32xf32>
    %cst = arith.constant dense<0.000000e+00> : vector<128x32xf32>
    %5 = tpu.matmul %0, %2, %cst {dimension_numbers = #tpu.dot_dimension_numbers<[1], [0], [0], [1], [0, 0, 1, 1], [], []>} : vector<128x32xf32>, vector<32x32xf32>, vector<128x32xf32> -> vector<128x32xf32>
    %cst_9 = arith.constant dense<0.000000e+00> : vector<128x32xf32>
    %6 = tpu.matmul %1, %3, %cst_9 {dimension_numbers = #tpu.dot_dimension_numbers<[1], [0], [0], [1], [0, 0, 1, 1], [], []>} : vector<128x32xf32>, vector<32x32xf32>, vector<128x32xf32> -> vector<128x32xf32>
    %7 = arith.addf %5, %6 : vector<128x32xf32>
    %8 = vector.broadcast %4 : vector<1x32xf32> to vector<128x32xf32>
    %9 = arith.addf %7, %8 : vector<128x32xf32>
    %cst_10 = arith.constant 0.000000e+00 : f32
    %10 = vector.broadcast %cst_10 : f32 to vector<128x32xf32>
    %11 = arith.maximumf %9, %10 : vector<128x32xf32>
    %c0_11 = arith.constant 0 : index
    %c0_12 = arith.constant 0 : index
    %12 = vector.load %arg6[%c0_11, %c0_12] : memref<32x16xf32, #tpu.memory_space<vmem>>, vector<32x16xf32>
    %c0_13 = arith.constant 0 : index
    %c0_14 = arith.constant 0 : index
    %13 = vector.load %arg7[%c0_13, %c0_14] : memref<1x16xf32, #tpu.memory_space<vmem>>, vector<1x16xf32>
    %cst_15 = arith.constant dense<0.000000e+00> : vector<128x16xf32>
    %14 = tpu.matmul %11, %12, %cst_15 {dimension_numbers = #tpu.dot_dimension_numbers<[1], [0], [0], [1], [0, 0, 1, 1], [], []>} : vector<128x32xf32>, vector<32x16xf32>, vector<128x16xf32> -> vector<128x16xf32>
    %15 = vector.broadcast %13 : vector<1x16xf32> to vector<128x16xf32>
    %16 = arith.addf %14, %15 : vector<128x16xf32>
    %cst_16 = arith.constant 0.000000e+00 : f32
    %17 = vector.broadcast %cst_16 : f32 to vector<128x16xf32>
    %18 = arith.maximumf %16, %17 : vector<128x16xf32>
    %c0_17 = arith.constant 0 : index
    %c0_18 = arith.constant 0 : index
    %19 = vector.load %arg8[%c0_17, %c0_18] : memref<1x16xf32, #tpu.memory_space<vmem>>, vector<1x16xf32>
    %c0_19 = arith.constant 0 : index
    %c0_20 = arith.constant 0 : index
    %20 = vector.load %arg9[%c0_19, %c0_20] : memref<1x1xf32, #tpu.memory_space<vmem>>, vector<1x1xf32>
    %cst_21 = arith.constant dense<0.000000e+00> : vector<1x128xf32>
    %21 = tpu.matmul %19, %18, %cst_21 {dimension_numbers = #tpu.dot_dimension_numbers<[1], [1], [0], [0], [0, 0, 1, 0], [], []>} : vector<1x16xf32>, vector<128x16xf32>, vector<1x128xf32> -> vector<1x128xf32>
    %22 = vector.broadcast %20 : vector<1x1xf32> to vector<1x128xf32>
    %23 = arith.addf %21, %22 : vector<1x128xf32>
    %c0_22 = arith.constant 0 : index
    %c0_23 = arith.constant 0 : index
    %24 = vector.load %arg10[%c0_22, %c0_23] : memref<1x128xf32, #tpu.memory_space<vmem>>, vector<1x128xf32>
    tpu.vector_store %arg10[%c0_22, %c0_23], %23 {strides = array<i32>} : memref<1x128xf32, #tpu.memory_space<vmem>>, vector<1x128xf32>,
    return
  }
  func.func @transform_0(%arg0: i32) -> (i32, i32) {
    %c0_i32 = arith.constant 0 : i32
    %c0_i32_0 = arith.constant 0 : i32
    return %arg0, %c0_i32 : i32, i32
  }
  func.func @transform_1(%arg0: i32) -> (i32, i32) {
    %c0_i32 = arith.constant 0 : i32
    %c0_i32_0 = arith.constant 0 : i32
    return %arg0, %c0_i32 : i32, i32
  }
  func.func @transform_2(%arg0: i32) -> (i32, i32) {
    %c0_i32 = arith.constant 0 : i32
    %c0_i32_0 = arith.constant 0 : i32
    %c0_i32_1 = arith.constant 0 : i32
    return %c0_i32, %c0_i32_0 : i32, i32
  }
  func.func @transform_3(%arg0: i32) -> (i32, i32) {
    %c0_i32 = arith.constant 0 : i32
    %c0_i32_0 = arith.constant 0 : i32
    %c0_i32_1 = arith.constant 0 : i32
    return %c0_i32, %c0_i32_0 : i32, i32
  }
  func.func @transform_4(%arg0: i32) -> (i32, i32) {
    %c0_i32 = arith.constant 0 : i32
    %c0_i32_0 = arith.constant 0 : i32
    %c0_i32_1 = arith.constant 0 : i32
    return %c0_i32, %c0_i32_0 : i32, i32
  }
  func.func @transform_5(%arg0: i32) -> (i32, i32) {
    %c0_i32 = arith.constant 0 : i32
    %c0_i32_0 = arith.constant 0 : i32
    %c0_i32_1 = arith.constant 0 : i32
    return %c0_i32, %c0_i32_0 : i32, i32
  }
  func.func @transform_6(%arg0: i32) -> (i32, i32) {
    %c0_i32 = arith.constant 0 : i32
    %c0_i32_0 = arith.constant 0 : i32
    %c0_i32_1 = arith.constant 0 : i32
    return %c0_i32, %c0_i32_0 : i32, i32
  }
  func.func @transform_7(%arg0: i32) -> (i32, i32) {
    %c0_i32 = arith.constant 0 : i32
    %c0_i32_0 = arith.constant 0 : i32
    %c0_i32_1 = arith.constant 0 : i32
    return %c0_i32, %c0_i32_0 : i32, i32
  }
  func.func @transform_8(%arg0: i32) -> (i32, i32) {
    %c0_i32 = arith.constant 0 : i32
    %c0_i32_0 = arith.constant 0 : i32
    %c0_i32_1 = arith.constant 0 : i32
    return %c0_i32, %c0_i32_0 : i32, i32
  }
  func.func @transform_9(%arg0: i32) -> (i32, i32) {
    %c0_i32 = arith.constant 0 : i32
    %c0_i32_0 = arith.constant 0 : i32
    return %arg0, %c0_i32 : i32, i32
  }
}

</mosaic_0001>

<llo_original>
// kernel: tpu_custom_call.1
$region0: #{tpu_custom_call.1}
  #allocation0 [shape = 'u32[]', space=smem, size = 0x4, offset = 0x4, fixed_abs, tag = 'smem constant byte address 0x4 - core index']
  #allocation1 [shape = 'u32[144,128]{1,0:T(1,128)}', space=vmem, size = 0x12000, scoped, tag = 'internal scratch']
  #allocation2 [shape = 'f32[1,1]{1,0:T(1,128)S(1)}', space=vmem, size = 0x200, scoped, tag = 'scoped memory for tpu_custom_call.1']
  %s0 = inlined_call_operand.vmem [shape: f32[16,32], index: 0, kind: input, shape index: {}]
  %s1 = inlined_call_operand.hbm [shape: f32[16,32], index: 1, kind: input, shape index: {}]
  %s2 = inlined_call_operand.vmem [shape: f32[32,32], index: 2, kind: input, shape index: {}]
  %s3 = inlined_call_operand.hbm [shape: f32[32,32], index: 3, kind: input, shape index: {}]
  %s4 = inlined_call_operand.vmem [shape: f32[1,32], index: 4, kind: input, shape index: {}]
  %s5 = inlined_call_operand.vmem [shape: f32[32,16], index: 5, kind: input, shape index: {}]
  %s6 = inlined_call_operand.vmem [shape: f32[1,16], index: 6, kind: input, shape index: {}]
  %s7 = inlined_call_operand.vmem [shape: f32[1,16], index: 7, kind: input, shape index: {}]
  %s8 = inlined_call_operand.<no memory space> [shape: f32[1,1], index: 8, kind: input, shape index: {}]
  %s9 = inlined_call_operand.hbm [shape: f32[1,128], index: 9, kind: output, shape index: {}]
  %s10 = sld [smem:[#allocation0]]
  $region54: #{tpu_custom_call.1} parent=0
    _
  %s12 = ssub.s32 1, %s10
  %s13 = scalar_select 0, %s12, %s10
  %v14 = vstv %s8
  %15 = vst [vmem:[#allocation2] sm:$0x1] %v14
  $region1: #{tpu_custom_call.1} parent=0
    #allocation3 [shape = 'u8[65536]{0}', space=vmem, size = 0x10000, scoped, tag = 'input window, operand 1, single buffered']
    #allocation4 [shape = 's32[1]{0}', space=sflag, size = 0x4, scoped, tag = 'scoped memory for tpu_custom_call.1']
    #allocation5 [shape = 's32[1]{0}', space=sflag, size = 0x4, scoped, tag = 'scoped memory for tpu_custom_call.1']
    #allocation6 [shape = 'u8[16384]{0}', space=vmem, size = 0x4000, scoped, tag = 'input window, operand 3, single buffered']
    #allocation7 [shape = 's32[1]{0}', space=sflag, size = 0x4, scoped, tag = 'scoped memory for tpu_custom_call.1']
    #allocation8 [shape = 'u8[512]{0}', space=vmem, size = 0x400, scoped, tag = 'output window, operand 0, single buffered']
    %16 = vsyncpa [#allocation4], 0
    %17 = vsyncpa [#allocation7], 0
    %18 = vsyncpa [#allocation5], 0
    // Predicated region
    $region2: #{tpu_custom_call.1} parent=1 // pred_check
      _
    $region3: #{tpu_custom_call.1} parent=1 // pred_check_branch
      %20 = sbr.rel (0) target = $region5
    $region4: #{tpu_custom_call.1} parent=1 // pred_region
      _
    $region5: #{tpu_custom_call.1} parent=1 // pred_fallthru
      _
    // Predicated region
    $region6: #{tpu_custom_call.1} parent=1 // pred_check
      _
    $region7: #{tpu_custom_call.1} parent=1 // pred_check_branch
      %22 = sbr.rel (0) target = $region9
    $region8: #{tpu_custom_call.1} parent=1 // pred_region
      %s24 = ssub.s32 2048, 256
      %25 = vsyncadd [#allocation4], %s24
      %s26 = sshll.u32 [#allocation3], 4
      %s27 = int_to_ptr.vmem [resolvable:$true] %s26
      %32 = dma.hbm_to_vmem [thread:$0]  %s1, 256, %s27, [#allocation4], 128, 128, 8
    $region9: #{tpu_custom_call.1} parent=1 // pred_fallthru
      _
    // Predicated region
    $region10: #{tpu_custom_call.1} parent=1 // pred_check
      _
    $region11: #{tpu_custom_call.1} parent=1 // pred_check_branch
      %34 = sbr.rel (0) target = $region13
    $region12: #{tpu_custom_call.1} parent=1 // pred_region
      _
    $region13: #{tpu_custom_call.1} parent=1 // pred_fallthru
      _
    // Predicated region
    $region14: #{tpu_custom_call.1} parent=1 // pred_check
      _
    $region15: #{tpu_custom_call.1} parent=1 // pred_check_branch
      %36 = sbr.rel (0) target = $region17
    $region16: #{tpu_custom_call.1} parent=1 // pred_region
      %s38 = ssub.s32 512, 512
      %39 = vsyncadd [#allocation7], %s38
      %s40 = sshll.u32 [#allocation6], 4
      %s41 = int_to_ptr.vmem [resolvable:$true] %s40
      %46 = dma.hbm_to_vmem [thread:$0]  %s3, 512, %s41, [#allocation7], 128, 128, 8
    $region17: #{tpu_custom_call.1} parent=1 // pred_fallthru
      _
    // Predicated region
    $region18: #{tpu_custom_call.1} parent=1 // pred_check
      _
    $region19: #{tpu_custom_call.1} parent=1 // pred_check_branch
      %48 = sbr.rel (0) target = $region21
    $region20: #{tpu_custom_call.1} parent=1 // pred_region
      _
    $region21: #{tpu_custom_call.1} parent=1 // pred_fallthru
      _
    // Predicated region
    $region22: #{tpu_custom_call.1} parent=1 // pred_check
      _
    $region23: #{tpu_custom_call.1} parent=1 // pred_check_branch
      %50 = sbr.rel (0) target = $region25
    $region24: #{tpu_custom_call.1} parent=1 // pred_region
      _
    $region25: #{tpu_custom_call.1} parent=1 // pred_fallthru
      _
    // Predicated region
    $region26: #{tpu_custom_call.1} parent=1 // pred_check
      _
    $region27: #{tpu_custom_call.1} parent=1 // pred_check_branch
      %52 = sbr.rel (0) target = $region29
    $region28: #{tpu_custom_call.1} parent=1 // pred_region
      _
    $region29: #{tpu_custom_call.1} parent=1 // pred_fallthru
      _
    // Predicated region
    $region30: #{tpu_custom_call.1} parent=1 // pred_check
      _
    $region31: #{tpu_custom_call.1} parent=1 // pred_check_branch
      %54 = sbr.rel (0) target = $region33
    $region32: #{tpu_custom_call.1} parent=1 // pred_region
      _
    $region33: #{tpu_custom_call.1} parent=1 // pred_fallthru
      _
    // Predicated region
    $region34: #{tpu_custom_call.1} parent=1 // pred_check
      _
    $region35: #{tpu_custom_call.1} parent=1 // pred_check_branch
      %56 = sbr.rel (0) target = $region37
    $region36: #{tpu_custom_call.1} parent=1 // pred_region
      _
    $region37: #{tpu_custom_call.1} parent=1 // pred_fallthru
      _
    // Predicated region
    $region38: #{tpu_custom_call.1} parent=1 // pred_check
      _
    $region39: #{tpu_custom_call.1} parent=1 // pred_check_branch
      %58 = sbr.rel (0) target = $region41
    $region40: #{tpu_custom_call.1} parent=1 // pred_region
      %59 = dma.done [#allocation4], 2048
    $region41: #{tpu_custom_call.1} parent=1 // pred_fallthru
      _
    // Predicated region
    $region42: #{tpu_custom_call.1} parent=1 // pred_check
      _
    $region43: #{tpu_custom_call.1} parent=1 // pred_check_branch
      %61 = sbr.rel (0) target = $region45
    $region44: #{tpu_custom_call.1} parent=1 // pred_region
      %62 = dma.done [#allocation7], 512
    $region45: #{tpu_custom_call.1} parent=1 // pred_fallthru
      _
    %v63 = vld [vmem:[%s0] sm:$0xff]
    %v64 = vld [vmem:[%s0 + $0x8] sm:$0xff]
    %v65 = vld [vmem:[%s0 + $0x10] sm:$0xff]
    %v66 = vld [vmem:[%s0 + $0x18] sm:$0xff]
    %v67 = vld [vmem:[%s0 + $0x20] sm:$0xff]
    %v68 = vld [vmem:[%s0 + $0x28] sm:$0xff]
    %v69 = vld [vmem:[%s0 + $0x30] sm:$0xff]
    %v70 = vld [vmem:[%s0 + $0x38] sm:$0xff]
    %v71 = vld [vmem:[%s0 + $0x40] sm:$0xff]
    %v72 = vld [vmem:[%s0 + $0x48] sm:$0xff]
    %v73 = vld [vmem:[%s0 + $0x50] sm:$0xff]
    %v74 = vld [vmem:[%s0 + $0x58] sm:$0xff]
    %v75 = vld [vmem:[%s0 + $0x60] sm:$0xff]
    %v76 = vld [vmem:[%s0 + $0x68] sm:$0xff]
    %v77 = vld [vmem:[%s0 + $0x70] sm:$0xff]
    %v78 = vld [vmem:[%s0 + $0x78] sm:$0xff]
    %v79 = vld [vmem:[#allocation3] sm:$0xff]
    %v80 = vld [vmem:[#allocation3 + $0x8] sm:$0xff]
    %v81 = vld [vmem:[#allocation3 + $0x10] sm:$0xff]
    %v82 = vld [vmem:[#allocation3 + $0x18] sm:$0xff]
    %v83 = vld [vmem:[#allocation3 + $0x20] sm:$0xff]
    %v84 = vld [vmem:[#allocation3 + $0x28] sm:$0xff]
    %v85 = vld [vmem:[#allocation3 + $0x30] sm:$0xff]
    %v86 = vld [vmem:[#allocation3 + $0x38] sm:$0xff]
    %v87 = vld [vmem:[#allocation3 + $0x40] sm:$0xff]
    %v88 = vld [vmem:[#allocation3 + $0x48] sm:$0xff]
    %v89 = vld [vmem:[#allocation3 + $0x50] sm:$0xff]
    %v90 = vld [vmem:[#allocation3 + $0x58] sm:$0xff]
    %v91 = vld [vmem:[#allocation3 + $0x60] sm:$0xff]
    %v92 = vld [vmem:[#allocation3 + $0x68] sm:$0xff]
    %v93 = vld [vmem:[#allocation3 + $0x70] sm:$0xff]
    %v94 = vld [vmem:[#allocation3 + $0x78] sm:$0xff]
    %v95 = vld [vmem:[%s2] sm:$0xff]
    %v96 = vld [vmem:[%s2 + $0x8] sm:$0xff]
    %v97 = vld [vmem:[%s2 + $0x10] sm:$0xff]
    %v98 = vld [vmem:[%s2 + $0x18] sm:$0xff]
    %v99 = vld [vmem:[#allocation6] sm:$0xff]
    %v100 = vld [vmem:[#allocation6 + $0x8] sm:$0xff]
    %v101 = vld [vmem:[#allocation6 + $0x10] sm:$0xff]
    %v102 = vld [vmem:[#allocation6 + $0x18] sm:$0xff]
    %v103 = vld [vmem:[%s4] sm:$0x1]
    %vm104 = vcmask 261120
    %v106 = vsel %vm104, %v79, 0
    %v109 = vsel %vm104, %v80, 0
    %v112 = vsel %vm104, %v81, 0
    %v115 = vsel %vm104, %v82, 0
    %v118 = vsel %vm104, %v83, 0
    %v121 = vsel %vm104, %v84, 0
    %v124 = vsel %vm104, %v85, 0
    %v127 = vsel %vm104, %v86, 0
    %v130 = vsel %vm104, %v87, 0
    %v133 = vsel %vm104, %v88, 0
    %v136 = vsel %vm104, %v89, 0
    %v139 = vsel %vm104, %v90, 0
    %v142 = vsel %vm104, %v91, 0
    %v145 = vsel %vm104, %v92, 0
    %v148 = vsel %vm104, %v93, 0
    %v151 = vsel %vm104, %v94, 0
    %153 = vmatprep.subr.mxu0 0.0
    %154 = vmatpush1.msra.mxu0 %v99
    %155 = vmatprep.subr.mxu0 0.0
    %156 = vmatpush1.msra.mxu0 %v100
    %157 = vmatprep.subr.mxu0 0.0
    %158 = vmatpush1.msra.mxu0 %v101
    %159 = vmatprep.subr.mxu0 0.0
    %160 = vmatpush1.msra.mxu0 %v102
    %161 = vmatprep.subr.mxu0 0.0
    %162 = vmatpush1.msra.mxu0 0.0
    %163 = vmatprep.subr.mxu0 0.0
    %164 = vmatpush1.msra.mxu0 0.0
    %165 = vmatprep.subr.mxu0 0.0
    %166 = vmatpush1.msra.mxu0 0.0
    %167 = vmatprep.subr.mxu0 0.0
    %168 = vmatpush1.msra.mxu0 0.0
    %169 = vmatprep.subr.mxu0 0.0
    %170 = vmatpush1.msra.mxu0 0.0
    %171 = vmatprep.subr.mxu0 0.0
    %172 = vmatpush1.msra.mxu0 0.0
    %173 = vmatprep.subr.mxu0 0.0
    %174 = vmatpush1.msra.mxu0 0.0
    %175 = vmatprep.subr.mxu0 0.0
    %176 = vmatpush1.msra.mxu0 0.0
    %177 = vmatprep.subr.mxu0 0.0
    %178 = vmatpush1.msra.mxu0 0.0
    %179 = vmatprep.subr.mxu0 0.0
    %180 = vmatpush1.msra.mxu0 0.0
    %181 = vmatprep.subr.mxu0 0.0
    %182 = vmatpush1.msra.mxu0 0.0
    %183 = vmatprep.subr.mxu0 0.0
    %184 = vmatpush1.msra.mxu0 0.0
    %185 = vmatprep.subr.mxu0 0.0
    %186 = vmatpush1.msra.mxu0 0.0
    %187 = vmatprep.subr.mxu0 0.0
    %188 = vmatpush1.msra.mxu0 0.0
    %189 = vmatprep.subr.mxu0 0.0
    %190 = vmatpush1.msra.mxu0 0.0
    %191 = vmatprep.subr.mxu0 0.0
    %192 = vmatpush1.msra.mxu0 0.0
    %193 = vmatprep.subr.mxu0 0.0
    %194 = vmatpush1.msra.mxu0 0.0
    %195 = vmatprep.subr.mxu0 0.0
    %196 = vmatpush1.msra.mxu0 0.0
    %197 = vmatprep.subr.mxu0 0.0
    %198 = vmatpush1.msra.mxu0 0.0
    %199 = vmatprep.subr.mxu0 0.0
    %200 = vmatpush1.msra.mxu0 0.0
    %201 = vmatprep.subr.mxu0 0.0
    %202 = vmatpush1.msra.mxu0 0.0
    %203 = vmatprep.subr.mxu0 0.0
    %204 = vmatpush1.msra.mxu0 0.0
    %205 = vmatprep.subr.mxu0 0.0
    %206 = vmatpush1.msra.mxu0 0.0
    %207 = vmatprep.subr.mxu0 0.0
    %208 = vmatpush1.msra.mxu0 0.0
    %209 = vmatprep.subr.mxu0 0.0
    %210 = vmatpush1.msra.mxu0 0.0
    %211 = vmatprep.subr.mxu0 0.0
    %212 = vmatpush1.msra.mxu0 0.0
    %213 = vmatprep.subr.mxu0 0.0
    %214 = vmatpush1.msra.mxu0 0.0
    %215 = vmatprep.subr.mxu0 0.0
    %216 = vmatpush1.msra.mxu0 0.0
    %217 = vmatprep.mubr.f32.mxu0 0.0
    %218 = vmatmul.mubr.f32.gmra.mrb[0].mxu0 %v106
    %v219 = vpop.f32.mrb[0].mxu0
    %v220 = vadd.f32 0.0, %v219
    %v221 = vpop.f32.mrb[0].mxu0
    %222 = vmatprep.mubr.f32.mxu0 0.0
    %223 = vmatmul.mubr.f32.gmra.mrb[0].mxu0 %v109
    %v224 = vpop.f32.mrb[0].mxu0
    %v225 = vadd.f32 0.0, %v224
    %v226 = vpop.f32.mrb[0].mxu0
    %227 = vmatprep.mubr.f32.mxu0 0.0
    %228 = vmatmul.mubr.f32.gmra.mrb[0].mxu0 %v112
    %v229 = vpop.f32.mrb[0].mxu0
    %v230 = vadd.f32 0.0, %v229
    %v231 = vpop.f32.mrb[0].mxu0
    %232 = vmatprep.mubr.f32.mxu0 0.0
    %233 = vmatmul.mubr.f32.gmra.mrb[0].mxu0 %v115
    %v234 = vpop.f32.mrb[0].mxu0
    %v235 = vadd.f32 0.0, %v234
    %v236 = vpop.f32.mrb[0].mxu0
    %237 = vmatprep.mubr.f32.mxu0 0.0
    %238 = vmatmul.mubr.f32.gmra.mrb[0].mxu0 %v118
    %v239 = vpop.f32.mrb[0].mxu0
    %v240 = vadd.f32 0.0, %v239
    %v241 = vpop.f32.mrb[0].mxu0
    %242 = vmatprep.mubr.f32.mxu0 0.0
    %243 = vmatmul.mubr.f32.gmra.mrb[0].mxu0 %v121
    %v244 = vpop.f32.mrb[0].mxu0
    %v245 = vadd.f32 0.0, %v244
    %v246 = vpop.f32.mrb[0].mxu0
    %247 = vmatprep.mubr.f32.mxu0 0.0
    %248 = vmatmul.mubr.f32.gmra.mrb[0].mxu0 %v124
    %v249 = vpop.f32.mrb[0].mxu0
    %v250 = vadd.f32 0.0, %v249
    %v251 = vpop.f32.mrb[0].mxu0
    %252 = vmatprep.mubr.f32.mxu0 0.0
    %253 = vmatmul.mubr.f32.gmra.mrb[0].mxu0 %v127
    %v254 = vpop.f32.mrb[0].mxu0
    %v255 = vadd.f32 0.0, %v254
    %v256 = vpop.f32.mrb[0].mxu0
    %257 = vmatprep.mubr.f32.mxu0 0.0
    %258 = vmatmul.mubr.f32.gmra.mrb[0].mxu0 %v130
    %v259 = vpop.f32.mrb[0].mxu0
    %v260 = vadd.f32 0.0, %v259
    %v261 = vpop.f32.mrb[0].mxu0
    %262 = vmatprep.mubr.f32.mxu0 0.0
    %263 = vmatmul.mubr.f32.gmra.mrb[0].mxu0 %v133
    %v264 = vpop.f32.mrb[0].mxu0
    %v265 = vadd.f32 0.0, %v264
    %v266 = vpop.f32.mrb[0].mxu0
    %267 = vmatprep.mubr.f32.mxu0 0.0
    %268 = vmatmul.mubr.f32.gmra.mrb[0].mxu0 %v136
    %v269 = vpop.f32.mrb[0].mxu0
    %v270 = vadd.f32 0.0, %v269
    %v271 = vpop.f32.mrb[0].mxu0
    %272 = vmatprep.mubr.f32.mxu0 0.0
    %273 = vmatmul.mubr.f32.gmra.mrb[0].mxu0 %v139
    %v274 = vpop.f32.mrb[0].mxu0
    %v275 = vadd.f32 0.0, %v274
    %v276 = vpop.f32.mrb[0].mxu0
    %277 = vmatprep.mubr.f32.mxu0 0.0
    %278 = vmatmul.mubr.f32.gmra.mrb[0].mxu0 %v142
    %v279 = vpop.f32.mrb[0].mxu0
    %v280 = vadd.f32 0.0, %v279
    %v281 = vpop.f32.mrb[0].mxu0
    %282 = vmatprep.mubr.f32.mxu0 0.0
    %283 = vmatmul.mubr.f32.gmra.mrb[0].mxu0 %v145
    %v284 = vpop.f32.mrb[0].mxu0
    %v285 = vadd.f32 0.0, %v284
    %v286 = vpop.f32.mrb[0].mxu0
    %287 = vmatprep.mubr.f32.mxu0 0.0
    %288 = vmatmul.mubr.f32.gmra.mrb[0].mxu0 %v148
    %v289 = vpop.f32.mrb[0].mxu0
    %v290 = vadd.f32 0.0, %v289
    %v291 = vpop.f32.mrb[0].mxu0
    %292 = vmatprep.mubr.f32.mxu0 0.0
    %293 = vmatmul.mubr.f32.gmra.mrb[0].mxu0 %v151
    %v294 = vpop.f32.mrb[0].mxu0
    %v295 = vadd.f32 0.0, %v294
    %v296 = vpop.f32.mrb[0].mxu0
    %297 = vdwg.mxu0
    %v299 = vsel %vm104, %v63, 0
    %v302 = vsel %vm104, %v64, 0
    %v305 = vsel %vm104, %v65, 0
    %v308 = vsel %vm104, %v66, 0
    %v311 = vsel %vm104, %v67, 0
    %v314 = vsel %vm104, %v68, 0
    %v317 = vsel %vm104, %v69, 0
    %v320 = vsel %vm104, %v70, 0
    %v323 = vsel %vm104, %v71, 0
    %v326 = vsel %vm104, %v72, 0
    %v329 = vsel %vm104, %v73, 0
    %v332 = vsel %vm104, %v74, 0
    %v335 = vsel %vm104, %v75, 0
    %v338 = vsel %vm104, %v76, 0
    %v341 = vsel %vm104, %v77, 0
    %v344 = vsel %vm104, %v78, 0
    %346 = vmatprep.subr.mxu0 0.0
    %347 = vmatpush1.msra.mxu0 %v95
    %348 = vmatprep.subr.mxu0 0.0
    %349 = vmatpush1.msra.mxu0 %v96
    %350 = vmatprep.subr.mxu0 0.0
    %351 = vmatpush1.msra.mxu0 %v97
    %352 = vmatprep.subr.mxu0 0.0
    %353 = vmatpush1.msra.mxu0 %v98
    %354 = vmatprep.subr.mxu0 0.0
    %355 = vmatpush1.msra.mxu0 0.0
    %356 = vmatprep.subr.mxu0 0.0
    %357 = vmatpush1.msra.mxu0 0.0
    %358 = vmatprep.subr.mxu0 0.0
    %359 = vmatpush1.msra.mxu0 0.0
    %360 = vmatprep.subr.mxu0 0.0
    %361 = vmatpush1.msra.mxu0 0.0
    %362 = vmatprep.subr.mxu0 0.0
    %363 = vmatpush1.msra.mxu0 0.0
    %364 = vmatprep.subr.mxu0 0.0
    %365 = vmatpush1.msra.mxu0 0.0
    %366 = vmatprep.subr.mxu0 0.0
    %367 = vmatpush1.msra.mxu0 0.0
    %368 = vmatprep.subr.mxu0 0.0
    %369 = vmatpush1.msra.mxu0 0.0
    %370 = vmatprep.subr.mxu0 0.0
    %371 = vmatpush1.msra.mxu0 0.0
    %372 = vmatprep.subr.mxu0 0.0
    %373 = vmatpush1.msra.mxu0 0.0
    %374 = vmatprep.subr.mxu0 0.0
    %375 = vmatpush1.msra.mxu0 0.0
    %376 = vmatprep.subr.mxu0 0.0
    %377 = vmatpush1.msra.mxu0 0.0
    %378 = vmatprep.subr.mxu0 0.0
    %379 = vmatpush1.msra.mxu0 0.0
    %380 = vmatprep.subr.mxu0 0.0
    %381 = vmatpush1.msra.mxu0 0.0
    %382 = vmatprep.subr.mxu0 0.0
    %383 = vmatpush1.msra.mxu0 0.0
    %384 = vmatprep.subr.mxu0 0.0
    %385 = vmatpush1.msra.mxu0 0.0
    %386 = vmatprep.subr.mxu0 0.0
    %387 = vmatpush1.msra.mxu0 0.0
    %388 = vmatprep.subr.mxu0 0.0
    %389 = vmatpush1.msra.mxu0 0.0
    %390 = vmatprep.subr.mxu0 0.0
    %391 = vmatpush1.msra.mxu0 0.0
    %392 = vmatprep.subr.mxu0 0.0
    %393 = vmatpush1.msra.mxu0 0.0
    %394 = vmatprep.subr.mxu0 0.0
    %395 = vmatpush1.msra.mxu0 0.0
    %396 = vmatprep.subr.mxu0 0.0
    %397 = vmatpush1.msra.mxu0 0.0
    %398 = vmatprep.subr.mxu0 0.0
    %399 = vmatpush1.msra.mxu0 0.0
    %400 = vmatprep.subr.mxu0 0.0
    %401 = vmatpush1.msra.mxu0 0.0
    %402 = vmatprep.subr.mxu0 0.0
    %403 = vmatpush1.msra.mxu0 0.0
    %404 = vmatprep.subr.mxu0 0.0
    %405 = vmatpush1.msra.mxu0 0.0
    %406 = vmatprep.subr.mxu0 0.0
    %407 = vmatpush1.msra.mxu0 0.0
    %408 = vmatprep.subr.mxu0 0.0
    %409 = vmatpush1.msra.mxu0 0.0
    %410 = vmatprep.mubr.f32.mxu0 0.0
    %411 = vmatmul.mubr.f32.gmra.mrb[0].mxu0 %v299
    %v412 = vpop.f32.mrb[0].mxu0
    %v413 = vadd.f32 %v220, %v412
    %v414 = vpop.f32.mrb[0].mxu0
    %415 = vmatprep.mubr.f32.mxu0 0.0
    %416 = vmatmul.mubr.f32.gmra.mrb[0].mxu0 %v302
    %v417 = vpop.f32.mrb[0].mxu0
    %v418 = vadd.f32 %v225, %v417
    %v419 = vpop.f32.mrb[0].mxu0
    %420 = vmatprep.mubr.f32.mxu0 0.0
    %421 = vmatmul.mubr.f32.gmra.mrb[0].mxu0 %v305
    %v422 = vpop.f32.mrb[0].mxu0
    %v423 = vadd.f32 %v230, %v422
    %v424 = vpop.f32.mrb[0].mxu0
    %425 = vmatprep.mubr.f32.mxu0 0.0
    %426 = vmatmul.mubr.f32.gmra.mrb[0].mxu0 %v308
    %v427 = vpop.f32.mrb[0].mxu0
    %v428 = vadd.f32 %v235, %v427
    %v429 = vpop.f32.mrb[0].mxu0
    %430 = vmatprep.mubr.f32.mxu0 0.0
    %431 = vmatmul.mubr.f32.gmra.mrb[0].mxu0 %v311
    %v432 = vpop.f32.mrb[0].mxu0
    %v433 = vadd.f32 %v240, %v432
    %v434 = vpop.f32.mrb[0].mxu0
    %435 = vmatprep.mubr.f32.mxu0 0.0
    %436 = vmatmul.mubr.f32.gmra.mrb[0].mxu0 %v314
    %v437 = vpop.f32.mrb[0].mxu0
    %v438 = vadd.f32 %v245, %v437
    %v439 = vpop.f32.mrb[0].mxu0
    %440 = vmatprep.mubr.f32.mxu0 0.0
    %441 = vmatmul.mubr.f32.gmra.mrb[0].mxu0 %v317
    %v442 = vpop.f32.mrb[0].mxu0
    %v443 = vadd.f32 %v250, %v442
    %v444 = vpop.f32.mrb[0].mxu0
    %445 = vmatprep.mubr.f32.mxu0 0.0
    %446 = vmatmul.mubr.f32.gmra.mrb[0].mxu0 %v320
    %v447 = vpop.f32.mrb[0].mxu0
    %v448 = vadd.f32 %v255, %v447
    %v449 = vpop.f32.mrb[0].mxu0
    %450 = vmatprep.mubr.f32.mxu0 0.0
    %451 = vmatmul.mubr.f32.gmra.mrb[0].mxu0 %v323
    %v452 = vpop.f32.mrb[0].mxu0
    %v453 = vadd.f32 %v260, %v452
    %v454 = vpop.f32.mrb[0].mxu0
    %455 = vmatprep.mubr.f32.mxu0 0.0
    %456 = vmatmul.mubr.f32.gmra.mrb[0].mxu0 %v326
    %v457 = vpop.f32.mrb[0].mxu0
    %v458 = vadd.f32 %v265, %v457
    %v459 = vpop.f32.mrb[0].mxu0
    %460 = vmatprep.mubr.f32.mxu0 0.0
    %461 = vmatmul.mubr.f32.gmra.mrb[0].mxu0 %v329
    %v462 = vpop.f32.mrb[0].mxu0
    %v463 = vadd.f32 %v270, %v462
    %v464 = vpop.f32.mrb[0].mxu0
    %465 = vmatprep.mubr.f32.mxu0 0.0
    %466 = vmatmul.mubr.f32.gmra.mrb[0].mxu0 %v332
    %v467 = vpop.f32.mrb[0].mxu0
    %v468 = vadd.f32 %v275, %v467
    %v469 = vpop.f32.mrb[0].mxu0
    %470 = vmatprep.mubr.f32.mxu0 0.0
    %471 = vmatmul.mubr.f32.gmra.mrb[0].mxu0 %v335
    %v472 = vpop.f32.mrb[0].mxu0
    %v473 = vadd.f32 %v280, %v472
    %v474 = vpop.f32.mrb[0].mxu0
    %475 = vmatprep.mubr.f32.mxu0 0.0
    %476 = vmatmul.mubr.f32.gmra.mrb[0].mxu0 %v338
    %v477 = vpop.f32.mrb[0].mxu0
    %v478 = vadd.f32 %v285, %v477
    %v479 = vpop.f32.mrb[0].mxu0
    %480 = vmatprep.mubr.f32.mxu0 0.0
    %481 = vmatmul.mubr.f32.gmra.mrb[0].mxu0 %v341
    %v482 = vpop.f32.mrb[0].mxu0
    %v483 = vadd.f32 %v290, %v482
    %v484 = vpop.f32.mrb[0].mxu0
    %485 = vmatprep.mubr.f32.mxu0 0.0
    %486 = vmatmul.mubr.f32.gmra.mrb[0].mxu0 %v344
    %v487 = vpop.f32.mrb[0].mxu0
    %v488 = vadd.f32 %v295, %v487
    %v489 = vpop.f32.mrb[0].mxu0
    %490 = vdwg.mxu0
    %v492 = vlaneseq
    %v493 = vshrl.u32 %v492, 7
    %v494 = vsub.s32 0, %v493
    %v495 = vrot.slane %v103, %v494
    %v497 = vadd.f32 %v413, %v495
    %v498 = vadd.f32 %v418, %v495
    %v499 = vadd.f32 %v423, %v495
    %v500 = vadd.f32 %v428, %v495
    %v501 = vadd.f32 %v433, %v495
    %v502 = vadd.f32 %v438, %v495
    %v503 = vadd.f32 %v443, %v495
    %v504 = vadd.f32 %v448, %v495
    %v505 = vadd.f32 %v453, %v495
    %v506 = vadd.f32 %v458, %v495
    %v507 = vadd.f32 %v463, %v495
    %v508 = vadd.f32 %v468, %v495
    %v509 = vadd.f32 %v473, %v495
    %v510 = vadd.f32 %v478, %v495
    %v511 = vadd.f32 %v483, %v495
    %v512 = vadd.f32 %v488, %v495
    %v513 = vmax.f32 %v497, 0.0
    %v514 = vmax.f32 %v498, 0.0
    %v515 = vmax.f32 %v499, 0.0
    %v516 = vmax.f32 %v500, 0.0
    %v517 = vmax.f32 %v501, 0.0
    %v518 = vmax.f32 %v502, 0.0
    %v519 = vmax.f32 %v503, 0.0
    %v520 = vmax.f32 %v504, 0.0
    %v521 = vmax.f32 %v505, 0.0
    %v522 = vmax.f32 %v506, 0.0
    %v523 = vmax.f32 %v507, 0.0
    %v524 = vmax.f32 %v508, 0.0
    %v525 = vmax.f32 %v509, 0.0
    %v526 = vmax.f32 %v510, 0.0
    %v527 = vmax.f32 %v511, 0.0
    %v528 = vmax.f32 %v512, 0.0
    %v529 = vld [vmem:[%s5] sm:$0xff]
    %v530 = vld [vmem:[%s5 + $0x8] sm:$0xff]
    %v531 = vld [vmem:[%s5 + $0x10] sm:$0xff]
    %v532 = vld [vmem:[%s5 + $0x18] sm:$0xff]
    %v533 = vld [vmem:[%s6] sm:$0x1]
    %v535 = vlaneseq
    %v536 = vshrl.u32 %v535, 7
    %v537 = vsub.s32 0, %v536
    %v538 = vrot.slane %v533, %v537
    %v541 = vsel %vm104, %v513, 0
    %v544 = vsel %vm104, %v514, 0
    %v547 = vsel %vm104, %v515, 0
    %v550 = vsel %vm104, %v516, 0
    %v553 = vsel %vm104, %v517, 0
    %v556 = vsel %vm104, %v518, 0
    %v559 = vsel %vm104, %v519, 0
    %v562 = vsel %vm104, %v520, 0
    %v565 = vsel %vm104, %v521, 0
    %v568 = vsel %vm104, %v522, 0
    %v571 = vsel %vm104, %v523, 0
    %v574 = vsel %vm104, %v524, 0
    %v577 = vsel %vm104, %v525, 0
    %v580 = vsel %vm104, %v526, 0
    %v583 = vsel %vm104, %v527, 0
    %v586 = vsel %vm104, %v528, 0
    %588 = vmatprep.subr.mxu0 0.0
    %589 = vmatpush1.msra.mxu0 %v529
    %590 = vmatprep.subr.mxu0 0.0
    %591 = vmatpush1.msra.mxu0 %v530
    %592 = vmatprep.subr.mxu0 0.0
    %593 = vmatpush1.msra.mxu0 %v531
    %594 = vmatprep.subr.mxu0 0.0
    %595 = vmatpush1.msra.mxu0 %v532
    %596 = vmatprep.subr.mxu0 0.0
    %597 = vmatpush1.msra.mxu0 0.0
    %598 = vmatprep.subr.mxu0 0.0
    %599 = vmatpush1.msra.mxu0 0.0
    %600 = vmatprep.subr.mxu0 0.0
    %601 = vmatpush1.msra.mxu0 0.0
    %602 = vmatprep.subr.mxu0 0.0
    %603 = vmatpush1.msra.mxu0 0.0
    %604 = vmatprep.subr.mxu0 0.0
    %605 = vmatpush1.msra.mxu0 0.0
    %606 = vmatprep.subr.mxu0 0.0
    %607 = vmatpush1.msra.mxu0 0.0
    %608 = vmatprep.subr.mxu0 0.0
    %609 = vmatpush1.msra.mxu0 0.0
    %610 = vmatprep.subr.mxu0 0.0
    %611 = vmatpush1.msra.mxu0 0.0
    %612 = vmatprep.subr.mxu0 0.0
    %613 = vmatpush1.msra.mxu0 0.0
    %614 = vmatprep.subr.mxu0 0.0
    %615 = vmatpush1.msra.mxu0 0.0
    %616 = vmatprep.subr.mxu0 0.0
    %617 = vmatpush1.msra.mxu0 0.0
    %618 = vmatprep.subr.mxu0 0.0
    %619 = vmatpush1.msra.mxu0 0.0
    %620 = vmatprep.subr.mxu0 0.0
    %621 = vmatpush1.msra.mxu0 0.0
    %622 = vmatprep.subr.mxu0 0.0
    %623 = vmatpush1.msra.mxu0 0.0
    %624 = vmatprep.subr.mxu0 0.0
    %625 = vmatpush1.msra.mxu0 0.0
    %626 = vmatprep.subr.mxu0 0.0
    %627 = vmatpush1.msra.mxu0 0.0
    %628 = vmatprep.subr.mxu0 0.0
    %629 = vmatpush1.msra.mxu0 0.0
    %630 = vmatprep.subr.mxu0 0.0
    %631 = vmatpush1.msra.mxu0 0.0
    %632 = vmatprep.subr.mxu0 0.0
    %633 = vmatpush1.msra.mxu0 0.0
    %634 = vmatprep.subr.mxu0 0.0
    %635 = vmatpush1.msra.mxu0 0.0
    %636 = vmatprep.subr.mxu0 0.0
    %637 = vmatpush1.msra.mxu0 0.0
    %638 = vmatprep.subr.mxu0 0.0
    %639 = vmatpush1.msra.mxu0 0.0
    %640 = vmatprep.subr.mxu0 0.0
    %641 = vmatpush1.msra.mxu0 0.0
    %642 = vmatprep.subr.mxu0 0.0
    %643 = vmatpush1.msra.mxu0 0.0
    %644 = vmatprep.subr.mxu0 0.0
    %645 = vmatpush1.msra.mxu0 0.0
    %646 = vmatprep.subr.mxu0 0.0
    %647 = vmatpush1.msra.mxu0 0.0
    %648 = vmatprep.subr.mxu0 0.0
    %649 = vmatpush1.msra.mxu0 0.0
    %650 = vmatprep.subr.mxu0 0.0
    %651 = vmatpush1.msra.mxu0 0.0
    %652 = vmatprep.mubr.f32.mxu0 0.0
    %653 = vmatmul.mubr.f32.gmra.mrb[0].mxu0 %v541
    %v654 = vpop.f32.mrb[0].mxu0
    %v655 = vadd.f32 %v538, %v654
    %v656 = vpop.f32.mrb[0].mxu0
    %657 = vmatprep.mubr.f32.mxu0 0.0
    %658 = vmatmul.mubr.f32.gmra.mrb[0].mxu0 %v544
    %v659 = vpop.f32.mrb[0].mxu0
    %v660 = vadd.f32 %v538, %v659
    %v661 = vpop.f32.mrb[0].mxu0
    %662 = vmatprep.mubr.f32.mxu0 0.0
    %663 = vmatmul.mubr.f32.gmra.mrb[0].mxu0 %v547
    %v664 = vpop.f32.mrb[0].mxu0
    %v665 = vadd.f32 %v538, %v664
    %v666 = vpop.f32.mrb[0].mxu0
    %667 = vmatprep.mubr.f32.mxu0 0.0
    %668 = vmatmul.mubr.f32.gmra.mrb[0].mxu0 %v550
    %v669 = vpop.f32.mrb[0].mxu0
    %v670 = vadd.f32 %v538, %v669
    %v671 = vpop.f32.mrb[0].mxu0
    %672 = vmatprep.mubr.f32.mxu0 0.0
    %673 = vmatmul.mubr.f32.gmra.mrb[0].mxu0 %v553
    %v674 = vpop.f32.mrb[0].mxu0
    %v675 = vadd.f32 %v538, %v674
    %v676 = vpop.f32.mrb[0].mxu0
    %677 = vmatprep.mubr.f32.mxu0 0.0
    %678 = vmatmul.mubr.f32.gmra.mrb[0].mxu0 %v556
    %v679 = vpop.f32.mrb[0].mxu0
    %v680 = vadd.f32 %v538, %v679
    %v681 = vpop.f32.mrb[0].mxu0
    %682 = vmatprep.mubr.f32.mxu0 0.0
    %683 = vmatmul.mubr.f32.gmra.mrb[0].mxu0 %v559
    %v684 = vpop.f32.mrb[0].mxu0
    %v685 = vadd.f32 %v538, %v684
    %v686 = vpop.f32.mrb[0].mxu0
    %687 = vmatprep.mubr.f32.mxu0 0.0
    %688 = vmatmul.mubr.f32.gmra.mrb[0].mxu0 %v562
    %v689 = vpop.f32.mrb[0].mxu0
    %v690 = vadd.f32 %v538, %v689
    %v691 = vpop.f32.mrb[0].mxu0
    %692 = vmatprep.mubr.f32.mxu0 0.0
    %693 = vmatmul.mubr.f32.gmra.mrb[0].mxu0 %v565
    %v694 = vpop.f32.mrb[0].mxu0
    %v695 = vadd.f32 %v538, %v694
    %v696 = vpop.f32.mrb[0].mxu0
    %697 = vmatprep.mubr.f32.mxu0 0.0
    %698 = vmatmul.mubr.f32.gmra.mrb[0].mxu0 %v568
    %v699 = vpop.f32.mrb[0].mxu0
    %v700 = vadd.f32 %v538, %v699
    %v701 = vpop.f32.mrb[0].mxu0
    %702 = vmatprep.mubr.f32.mxu0 0.0
    %703 = vmatmul.mubr.f32.gmra.mrb[0].mxu0 %v571
    %v704 = vpop.f32.mrb[0].mxu0
    %v705 = vadd.f32 %v538, %v704
    %v706 = vpop.f32.mrb[0].mxu0
    %707 = vmatprep.mubr.f32.mxu0 0.0
    %708 = vmatmul.mubr.f32.gmra.mrb[0].mxu0 %v574
    %v709 = vpop.f32.mrb[0].mxu0
    %v710 = vadd.f32 %v538, %v709
    %v711 = vpop.f32.mrb[0].mxu0
    %712 = vmatprep.mubr.f32.mxu0 0.0
    %713 = vmatmul.mubr.f32.gmra.mrb[0].mxu0 %v577
    %v714 = vpop.f32.mrb[0].mxu0
    %v715 = vadd.f32 %v538, %v714
    %v716 = vpop.f32.mrb[0].mxu0
    %717 = vmatprep.mubr.f32.mxu0 0.0
    %718 = vmatmul.mubr.f32.gmra.mrb[0].mxu0 %v580
    %v719 = vpop.f32.mrb[0].mxu0
    %v720 = vadd.f32 %v538, %v719
    %v721 = vpop.f32.mrb[0].mxu0
    %722 = vmatprep.mubr.f32.mxu0 0.0
    %723 = vmatmul.mubr.f32.gmra.mrb[0].mxu0 %v583
    %v724 = vpop.f32.mrb[0].mxu0
    %v725 = vadd.f32 %v538, %v724
    %v726 = vpop.f32.mrb[0].mxu0
    %727 = vmatprep.mubr.f32.mxu0 0.0
    %728 = vmatmul.mubr.f32.gmra.mrb[0].mxu0 %v586
    %v729 = vpop.f32.mrb[0].mxu0
    %v730 = vadd.f32 %v538, %v729
    %v731 = vpop.f32.mrb[0].mxu0
    %732 = vdwg.mxu0
    %v733 = vmax.f32 %v655, 0.0
    %v734 = vmax.f32 %v660, 0.0
    %v735 = vmax.f32 %v665, 0.0
    %v736 = vmax.f32 %v670, 0.0
    %v737 = vmax.f32 %v675, 0.0
    %v738 = vmax.f32 %v680, 0.0
    %v739 = vmax.f32 %v685, 0.0
    %v740 = vmax.f32 %v690, 0.0
    %v741 = vmax.f32 %v695, 0.0
    %v742 = vmax.f32 %v700, 0.0
    %v743 = vmax.f32 %v705, 0.0
    %v744 = vmax.f32 %v710, 0.0
    %v745 = vmax.f32 %v715, 0.0
    %v746 = vmax.f32 %v720, 0.0
    %v747 = vmax.f32 %v725, 0.0
    %v748 = vmax.f32 %v730, 0.0
    %v749 = vld [vmem:[%s7] sm:$0x1]
    %v750 = vld [vmem:[#allocation2] sm:$0x1]
    %752 = vset.pattern.permute.xlu0 0
    %753 = vperm.xlu0 %752, %v750
    %v754 = vpop.permute.xlu0 %753
    %v756 = vlaneseq
    %v757 = vshrl.u32 %v756, 7
    %v758 = vsub.s32 0, %v757
    %v759 = vrot.slane %v754, %v758
    %vm760 = vcmask 130048
    %v762 = vsel %vm760, %v749, 0
    %v765 = vsel %vm760, %v733, 0
    %v768 = vsel %vm760, %v734, 0
    %v771 = vsel %vm760, %v735, 0
    %v774 = vsel %vm760, %v736, 0
    %v777 = vsel %vm760, %v737, 0
    %v780 = vsel %vm760, %v738, 0
    %v783 = vsel %vm760, %v739, 0
    %v786 = vsel %vm760, %v740, 0
    %v789 = vsel %vm760, %v741, 0
    %v792 = vsel %vm760, %v742, 0
    %v795 = vsel %vm760, %v743, 0
    %v798 = vsel %vm760, %v744, 0
    %v801 = vsel %vm760, %v745, 0
    %v804 = vsel %vm760, %v746, 0
    %v807 = vsel %vm760, %v747, 0
    %v810 = vsel %vm760, %v748, 0
    %812 = vmatprep.subr.mxu0 0.0
    %813 = vmatpush1.xpose.msra.mxu0 %v765
    %814 = vmatprep.subr.mxu0 0.0
    %815 = vmatpush1.xpose.msra.mxu0 %v768
    %816 = vmatprep.subr.mxu0 0.0
    %817 = vmatpush1.xpose.msra.mxu0 %v771
    %818 = vmatprep.subr.mxu0 0.0
    %819 = vmatpush1.xpose.msra.mxu0 %v774
    %820 = vmatprep.subr.mxu0 0.0
    %821 = vmatpush1.xpose.msra.mxu0 %v777
    %822 = vmatprep.subr.mxu0 0.0
    %823 = vmatpush1.xpose.msra.mxu0 %v780
    %824 = vmatprep.subr.mxu0 0.0
    %825 = vmatpush1.xpose.msra.mxu0 %v783
    %826 = vmatprep.subr.mxu0 0.0
    %827 = vmatpush1.xpose.msra.mxu0 %v786
    %828 = vmatprep.subr.mxu0 0.0
    %829 = vmatpush1.xpose.msra.mxu0 %v789
    %830 = vmatprep.subr.mxu0 0.0
    %831 = vmatpush1.xpose.msra.mxu0 %v792
    %832 = vmatprep.subr.mxu0 0.0
    %833 = vmatpush1.xpose.msra.mxu0 %v795
    %834 = vmatprep.subr.mxu0 0.0
    %835 = vmatpush1.xpose.msra.mxu0 %v798
    %836 = vmatprep.subr.mxu0 0.0
    %837 = vmatpush1.xpose.msra.mxu0 %v801
    %838 = vmatprep.subr.mxu0 0.0
    %839 = vmatpush1.xpose.msra.mxu0 %v804
    %840 = vmatprep.subr.mxu0 0.0
    %841 = vmatpush1.xpose.msra.mxu0 %v807
    %842 = vmatprep.subr.mxu0 0.0
    %843 = vmatpush1.xpose.msra.mxu0 %v810
    %844 = vmatprep.subr.mxu0 0.0
    %845 = vmatpush1.xpose.msra.mxu0 0.0
    %846 = vmatprep.subr.mxu0 0.0
    %847 = vmatpush1.xpose.msra.mxu0 0.0
    %848 = vmatprep.subr.mxu0 0.0
    %849 = vmatpush1.xpose.msra.mxu0 0.0
    %850 = vmatprep.subr.mxu0 0.0
    %851 = vmatpush1.xpose.msra.mxu0 0.0
    %852 = vmatprep.subr.mxu0 0.0
    %853 = vmatpush1.xpose.msra.mxu0 0.0
    %854 = vmatprep.subr.mxu0 0.0
    %855 = vmatpush1.xpose.msra.mxu0 0.0
    %856 = vmatprep.subr.mxu0 0.0
    %857 = vmatpush1.xpose.msra.mxu0 0.0
    %858 = vmatprep.subr.mxu0 0.0
    %859 = vmatpush1.xpose.msra.mxu0 0.0
    %860 = vmatprep.subr.mxu0 0.0
    %861 = vmatpush1.xpose.msra.mxu0 0.0
    %862 = vmatprep.subr.mxu0 0.0
    %863 = vmatpush1.xpose.msra.mxu0 0.0
    %864 = vmatprep.subr.mxu0 0.0
    %865 = vmatpush1.xpose.msra.mxu0 0.0
    %866 = vmatprep.subr.mxu0 0.0
    %867 = vmatpush1.xpose.msra.mxu0 0.0
    %868 = vmatprep.subr.mxu0 0.0
    %869 = vmatpush1.xpose.msra.mxu0 0.0
    %870 = vmatprep.subr.mxu0 0.0
    %871 = vmatpush1.xpose.msra.mxu0 0.0
    %872 = vmatprep.subr.mxu0 0.0
    %873 = vmatpush1.xpose.msra.mxu0 0.0
    %874 = vmatprep.subr.mxu0 0.0
    %875 = vmatpush1.xpose.msra.mxu0 0.0
    %876 = vmatprep.mubr.f32.mxu0 0.0
    %877 = vmatmul.mubr.f32.gmra.mrb[0].mxu0 %v762
    %v878 = vpop.f32.mrb[0].mxu0
    %v879 = vadd.f32 %v759, %v878
    %v880 = vpop.f32.mrb[0].mxu0
    %881 = vdwg.mxu0
    %882 = vst [vmem:[#allocation8] sm:$0x1] %v879
    // Predicated region
    $region46: #{tpu_custom_call.1} parent=1 // pred_check
      _
    $region47: #{tpu_custom_call.1} parent=1 // pred_check_branch
      %884 = sbr.rel (0) target = $region49
    $region48: #{tpu_custom_call.1} parent=1 // pred_region
      %s886 = ssub.s32 16, 16
      %887 = vsyncadd [#allocation5], %s886
      %s889 = sshll.u32 [#allocation8], 4
      %s890 = int_to_ptr.vmem [resolvable:$true] %s889
      %892 = dma.vmem_to_hbm [thread:$0]  %s890, 16, %s9, [#allocation5]
    $region49: #{tpu_custom_call.1} parent=1 // pred_fallthru
      _
    // Predicated region
    $region50: #{tpu_custom_call.1} parent=1 // pred_check
      _
    $region51: #{tpu_custom_call.1} parent=1 // pred_check_branch
      %894 = sbr.rel (0) target = $region53
    $region52: #{tpu_custom_call.1} parent=1 // pred_region
      %895 = dma.done [#allocation5], 16
    $region53: #{tpu_custom_call.1} parent=1 // pred_fallthru
      _
    %896 = vsyncpa [#allocation4], 1
    %897 = vsyncpa [#allocation7], 1
    %898 = vsyncpa [#allocation5], 1

</llo_original>
